<compile_context>
chip_gen: v5e
topology: v5e:2x2
jax: 0.10.0
libtpu: 0.0.40
codegen_flags: <defaults>
</compile_context>

<pallas_src>
import functools

import jax
import jax.numpy as jnp
from jax.experimental import pallas as pl
from jax.experimental.pallas import tpu as pltpu


def _round_up(n, m=128):
    return ((n + m - 1) // m) * m


def _strategies_allocator_kernel(n_hidden, bn_eps, half, f_pad,
                                 x_ref, wblob_ref, pblob_ref, out_ref):
    """Fused forward pass for one independent (B, F_PAD) batch slab.

    x_ref     : (B, F_PAD) f32                      -- input (zero-padded lanes)
    wblob_ref : ((n_hidden+1)*F_PAD, F_PAD) bf16    -- [w_1; ...; w_n; w_out]
    pblob_ref : (2*n_hidden + 1, F_PAD) f32         -- [g_1, b_1, ..., g_n, b_n, b_out]
    out_ref   : (B, F_PAD) f32                      -- lanes [:half]=mu,
                                                       [half:out_dim]=sigma, rest pad
    """
    x = x_ref[...]
    pblob = pblob_ref[...]                      # one DMA for all small params
    inv_b = jnp.float32(1.0 / x_ref.shape[0])   # static batch size

    for i in range(n_hidden):
        w = wblob_ref[i * f_pad:(i + 1) * f_pad, :]        # static bf16 slice
        gamma = pblob[2 * i:2 * i + 1, :]
        beta = pblob[2 * i + 1:2 * i + 2, :]

        # Linear on the MXU with bf16 inputs / f32 accumulation. Hidden bias
        # omitted: exactly cancelled by the BatchNorm mean subtraction.
        h = jnp.dot(x.astype(jnp.bfloat16), w,
                    preferred_element_type=jnp.float32)

        # Fused BatchNorm1d (training-mode batch stats, biased variance):
        # single pass (sum + sum-of-squares), then one scale/shift apply.
        s = jnp.sum(h, axis=0, keepdims=True)
        ss = jnp.sum(h * h, axis=0, keepdims=True)
        mean = s * inv_b
        var = jnp.maximum(ss * inv_b - mean * mean, 0.0)
        scale = gamma * jax.lax.rsqrt(var + bn_eps)
        shift = beta - mean * scale

        # BN affine + ReLU.  Padded lanes stay 0 because gamma/beta pad to 0.
        x = jnp.maximum(h * scale + shift, 0.0)

    w_out = wblob_ref[n_hidden * f_pad:(n_hidden + 1) * f_pad, :]
    b_out = pblob[2 * n_hidden:2 * n_hidden + 1, :]
    y = jnp.dot(x.astype(jnp.bfloat16), w_out,
                preferred_element_type=jnp.float32) + b_out

    # single-transcendental softplus (one exp + one log1p per element)
    sp = jnp.maximum(y, 0.0) + jnp.log1p(jnp.exp(-jnp.abs(y)))

    # one lane-dense (B, F_PAD) store; sigma lanes get softplus(.) + 1e-6
    lane = jax.lax.broadcasted_iota(jnp.int32, y.shape, 1)
    out_ref[...] = jnp.where(lane >= half, sp + 1e-6, y)


def pack_params(params, in_dim, hidden_dim, out_dim):
    """Pad / pack raw params (PyTorch layout) into two kernel blobs.

    Raw params (flat): [w1, b1, gamma1, beta1, ..., w_out, b_out], w = (F_in, F_out).
    Hidden biases b_i are dropped (exactly cancelled by BatchNorm).
    Returns (wblob_bf16, pblob_f32, f_pad).
    """
    n_hidden = len(hidden_dim)
    f_pad = _round_up(max([in_dim] + list(hidden_dim) + [out_dim]))

    wblob = jnp.zeros(((n_hidden + 1) * f_pad, f_pad), jnp.float32)
    pblob = jnp.zeros((2 * n_hidden + 1, f_pad), jnp.float32)

    idx = 0
    prev = in_dim
    for i, h in enumerate(hidden_dim):
        w, _b, gamma, beta = params[idx:idx + 4]
        idx += 4
        wblob = wblob.at[i * f_pad:i * f_pad + prev, :h].set(w)
        pblob = pblob.at[2 * i, :h].set(gamma.reshape(-1))
        pblob = pblob.at[2 * i + 1, :h].set(beta.reshape(-1))
        prev = h

    w_out, b_out = params[idx], params[idx + 1]
    wblob = wblob.at[n_hidden * f_pad:n_hidden * f_pad + prev, :out_dim].set(w_out)
    pblob = pblob.at[2 * n_hidden, :out_dim].set(b_out.reshape(-1))
    return wblob.astype(jnp.bfloat16), pblob, f_pad


def strategies_allocator_forward(x, packed, out_dim, bn_eps=1e-5):
    """x: (B, in_dim) for one batch, or (N, B, in_dim) for N independent slabs
    (each slab gets its own full-batch BN stats, weights stay VMEM-resident)."""
    wblob, pblob, f_pad = packed
    n_hidden = (pblob.shape[0] - 1) // 2
    half = out_dim // 2

    squeeze = (x.ndim == 2)
    if squeeze:
        x = x[None]
    n, b, in_dim = x.shape

    # lane-dense (B, 128) input slab: pad feature dim with zeros
    xp = jnp.zeros((n, b, f_pad), jnp.float32).at[:, :, :in_dim].set(x)

    kernel = functools.partial(
        _strategies_allocator_kernel, n_hidden, bn_eps, half, f_pad)

    y = pl.pallas_call(
        kernel,
        out_shape=jax.ShapeDtypeStruct((n, b, f_pad), jnp.float32),
        grid_spec=pltpu.PrefetchScalarGridSpec(
            num_scalar_prefetch=0,
            grid=(n,),
            in_specs=[
                pl.BlockSpec((None, b, f_pad), lambda i: (i, 0, 0)),
                pl.BlockSpec(wblob.shape, lambda i: (0, 0)),  # DMA once, VMEM-resident
                pl.BlockSpec(pblob.shape, lambda i: (0, 0)),  # DMA once, VMEM-resident
            ],
            out_specs=pl.BlockSpec((None, b, f_pad), lambda i: (i, 0, 0)),
        ),
        # footprint < 0.5 MiB incl. double buffers -> default scoped VMEM is fine
        compiler_params=pltpu.CompilerParams(
            dimension_semantics=("parallel",)),   # shards slabs over v7x's 2 TCs
    )(xp, wblob, pblob)

    mu = y[..., :half]
    sigma = y[..., half:out_dim]
    if squeeze:
        mu, sigma = mu[0], sigma[0]
    return mu, sigma


def _init_params(key, in_dim, hidden_dim, out_dim):
    """Deterministic synthetic parameters (same shapes as the PyTorch module)."""
    params = []
    h_in = in_dim
    for h_out in hidden_dim:
        key, k_w, k_b = jax.random.split(key, 3)
        bound = 1.0 / jnp.sqrt(h_in)
        w = jax.random.uniform(k_w, (h_in, h_out), jnp.float32, -bound, bound)
        b = jax.random.uniform(k_b, (1, h_out), jnp.float32, -bound, bound)
        gamma = jnp.ones((1, h_out), jnp.float32)     # BN weight
        beta = jnp.zeros((1, h_out), jnp.float32)     # BN bias
        params += [w, b, gamma, beta]
        h_in = h_out
    key, k_w, k_b = jax.random.split(key, 3)
    bound = 1.0 / jnp.sqrt(h_in)
    w_out = jax.random.uniform(k_w, (h_in, out_dim), jnp.float32, -bound, bound)
    b_out = jax.random.uniform(k_b, (1, out_dim), jnp.float32, -bound, bound)
    params += [w_out, b_out]
    return params


def _reference_forward(x, params, out_dim, bn_eps=1e-5, bf16_matmul=False):
    """Pure-JAX reference matching the PyTorch module (training-mode BN).

    bf16_matmul=True mimics the kernel's deliberate bf16 MXU inputs (f32
    accumulation) so the rest of the kernel can be checked at tight tolerance.
    """
    def mm(a, w):
        if bf16_matmul:
            return jnp.dot(a.astype(jnp.bfloat16), w.astype(jnp.bfloat16),
                           preferred_element_type=jnp.float32)
        return jnp.dot(a, w, preferred_element_type=jnp.float32,
                       precision=jax.lax.Precision.HIGHEST)

    n_hidden = (len(params) - 2) // 4
    idx = 0
    h = x
    for _ in range(n_hidden):
        w, b, gamma, beta = params[idx:idx + 4]
        idx += 4
        h = mm(h, w) + b
        mean = jnp.mean(h, axis=0, keepdims=True)
        var = jnp.mean((h - mean) ** 2, axis=0, keepdims=True)
        h = (h - mean) / jnp.sqrt(var + bn_eps) * gamma + beta
        h = jax.nn.relu(h)
    y = mm(h, params[idx]) + params[idx + 1]
    mu, logsigma = jnp.split(y, 2, axis=-1)
    return mu, jax.nn.softplus(logsigma) + 1e-6


if __name__ == "__main__":
    B, in_dim, out_dim = 8, 32, 16
    hidden_dim = (64, 64)

    key = jax.random.PRNGKey(0)
    key, k_x, k_xs = jax.random.split(key, 3)
    x = jax.random.normal(k_x, (B, in_dim), jnp.float32)
    params = _init_params(key, in_dim, hidden_dim, out_dim)

    packed = pack_params(params, in_dim, hidden_dim, out_dim)

    # --- single (B, in_dim) batch (grid of size 1) ---
    mu, sigma = strategies_allocator_forward(x, packed, out_dim)
    jax.block_until_ready((mu, sigma))

    # tight check vs. a reference that also uses bf16 MXU inputs (validates
    # packing / BN fusion / softplus exactly)
    ref_mu_b, ref_sigma_b = _reference_forward(x, params, out_dim, bf16_matmul=True)
    assert jnp.allclose(mu, ref_mu_b, atol=2e-3, rtol=2e-3)
    assert jnp.allclose(sigma, ref_sigma_b, atol=2e-3, rtol=2e-3)

    # loose check vs. the full-f32 PyTorch-faithful reference (slack accounts
    # for the deliberate bf16 MXU-input optimization)
    ref_mu, ref_sigma = _reference_forward(x, params, out_dim)
    assert jnp.allclose(mu, ref_mu, atol=3e-2, rtol=3e-2)
    assert jnp.allclose(sigma, ref_sigma, atol=3e-2, rtol=3e-2)

    # --- N independent slabs in one pallas_call (VMEM-resident weights,
    #     "parallel" grid axis) ---
    N = 4
    xs = jax.random.normal(k_xs, (N, B, in_dim), jnp.float32)
    mus, sigmas = strategies_allocator_forward(xs, packed, out_dim)
    jax.block_until_ready((mus, sigmas))
    for i in range(N):
        r_mu, r_sig = _reference_forward(xs[i], params, out_dim, bf16_matmul=True)
        assert jnp.allclose(mus[i], r_mu, atol=2e-3, rtol=2e-3)
        assert jnp.allclose(sigmas[i], r_sig, atol=2e-3, rtol=2e-3)

    print("KERNEL_OK")
</pallas_src>

<mosaic_0001>
module attributes {stable_mosaic.version = 11 : i64} {
  func.func @_strategies_allocator_kernel(%arg0: i32, %arg1: memref<1x8x128xf32, #tpu.memory_space<vmem>>, %arg2: memref<384x128xbf16, #tpu.memory_space<vmem>>, %arg3: memref<5x128xf32, #tpu.memory_space<vmem>>, %arg4: memref<1x8x128xf32, #tpu.memory_space<vmem>>) attributes {dimension_semantics = [#tpu.dimension_semantics<parallel>], iteration_bounds = array<i64: 1>, scalar_prefetch = 0 : i64, scratch_operands = 0 : i64, tpu.core_type = #tpu.core_type<tc>, window_params = [{transform_indices = @transform_0, window_bounds = array<i64: 1, 8, 128>}, {pipeline_mode = #tpu.pipeline_mode<synchronous>, transform_indices = @transform_1, window_bounds = array<i64: 384, 128>}, {pipeline_mode = #tpu.pipeline_mode<synchronous>, transform_indices = @transform_2, window_bounds = array<i64: 5, 128>}, {transform_indices = @transform_3, window_bounds = array<i64: 1, 8, 128>}]} {
    %c0 = arith.constant 0 : index
    %c0_0 = arith.constant 0 : index
    %c0_1 = arith.constant 0 : index
    %0 = vector.load %arg1[%c0, %c0_0, %c0_1] : memref<1x8x128xf32, #tpu.memory_space<vmem>>, vector<1x8x128xf32>
    %1 = vector.shape_cast %0 : vector<1x8x128xf32> to vector<8x128xf32>
    %c0_2 = arith.constant 0 : index
    %c0_3 = arith.constant 0 : index
    %2 = vector.load %arg3[%c0_2, %c0_3] : memref<5x128xf32, #tpu.memory_space<vmem>>, vector<5x128xf32>
    %c0_4 = arith.constant 0 : index
    %c0_5 = arith.constant 0 : index
    %3 = vector.load %arg2[%c0_4, %c0_5] : memref<384x128xbf16, #tpu.memory_space<vmem>>, vector<128x128xbf16>
    %4 = vector.extract_strided_slice %2 {offsets = [0, 0], sizes = [1, 128], strides = [1, 1]} : vector<5x128xf32> to vector<1x128xf32>
    %5 = vector.extract_strided_slice %2 {offsets = [1, 0], sizes = [1, 128], strides = [1, 1]} : vector<5x128xf32> to vector<1x128xf32>
    %6 = arith.truncf %1 : vector<8x128xf32> to vector<8x128xbf16>
    %cst = arith.constant dense<0.000000e+00> : vector<8x128xf32>
    %7 = tpu.matmul %6, %3, %cst {dimension_numbers = #tpu.dot_dimension_numbers<[1], [0], [0], [1], [0, 0, 1, 1], [], []>} : vector<8x128xbf16>, vector<128x128xbf16>, vector<8x128xf32> -> vector<8x128xf32>
    %cst_6 = arith.constant dense<0.000000e+00> : vector<128xf32>
    %8 = vector.multi_reduction <add>, %7, %cst_6 [0] : vector<8x128xf32> to vector<128xf32>
    %9 = vector.shape_cast %8 : vector<128xf32> to vector<1x128xf32>
    %10 = arith.mulf %7, %7 : vector<8x128xf32>
    %cst_7 = arith.constant dense<0.000000e+00> : vector<128xf32>
    %11 = vector.multi_reduction <add>, %10, %cst_7 [0] : vector<8x128xf32> to vector<128xf32>
    %12 = vector.shape_cast %11 : vector<128xf32> to vector<1x128xf32>
    %cst_8 = arith.constant 1.250000e-01 : f32
    %13 = vector.broadcast %cst_8 : f32 to vector<1x128xf32>
    %14 = arith.mulf %9, %13 : vector<1x128xf32>
    %cst_9 = arith.constant 1.250000e-01 : f32
    %15 = vector.broadcast %cst_9 : f32 to vector<1x128xf32>
    %16 = arith.mulf %12, %15 : vector<1x128xf32>
    %17 = arith.mulf %14, %14 : vector<1x128xf32>
    %18 = arith.subf %16, %17 : vector<1x128xf32>
    %cst_10 = arith.constant 0.000000e+00 : f32
    %19 = vector.broadcast %cst_10 : f32 to vector<1x128xf32>
    %20 = arith.maximumf %18, %19 : vector<1x128xf32>
    %cst_11 = arith.constant 9.99999974E-6 : f32
    %21 = vector.broadcast %cst_11 : f32 to vector<1x128xf32>
    %22 = arith.addf %20, %21 : vector<1x128xf32>
    %23 = math.rsqrt %22 : vector<1x128xf32>
    %24 = arith.mulf %4, %23 : vector<1x128xf32>
    %25 = arith.mulf %14, %24 : vector<1x128xf32>
    %26 = arith.subf %5, %25 : vector<1x128xf32>
    %27 = vector.broadcast %24 : vector<1x128xf32> to vector<8x128xf32>
    %28 = arith.mulf %7, %27 : vector<8x128xf32>
    %29 = vector.broadcast %26 : vector<1x128xf32> to vector<8x128xf32>
    %30 = arith.addf %28, %29 : vector<8x128xf32>
    %cst_12 = arith.constant 0.000000e+00 : f32
    %31 = vector.broadcast %cst_12 : f32 to vector<8x128xf32>
    %32 = arith.maximumf %30, %31 : vector<8x128xf32>
    %c128 = arith.constant 128 : index
    %c0_13 = arith.constant 0 : index
    %33 = vector.load %arg2[%c128, %c0_13] : memref<384x128xbf16, #tpu.memory_space<vmem>>, vector<128x128xbf16>
    %34 = vector.extract_strided_slice %2 {offsets = [2, 0], sizes = [1, 128], strides = [1, 1]} : vector<5x128xf32> to vector<1x128xf32>
    %35 = vector.extract_strided_slice %2 {offsets = [3, 0], sizes = [1, 128], strides = [1, 1]} : vector<5x128xf32> to vector<1x128xf32>
    %36 = arith.truncf %32 : vector<8x128xf32> to vector<8x128xbf16>
    %cst_14 = arith.constant dense<0.000000e+00> : vector<8x128xf32>
    %37 = tpu.matmul %36, %33, %cst_14 {dimension_numbers = #tpu.dot_dimension_numbers<[1], [0], [0], [1], [0, 0, 1, 1], [], []>} : vector<8x128xbf16>, vector<128x128xbf16>, vector<8x128xf32> -> vector<8x128xf32>
    %cst_15 = arith.constant dense<0.000000e+00> : vector<128xf32>
    %38 = vector.multi_reduction <add>, %37, %cst_15 [0] : vector<8x128xf32> to vector<128xf32>
    %39 = vector.shape_cast %38 : vector<128xf32> to vector<1x128xf32>
    %40 = arith.mulf %37, %37 : vector<8x128xf32>
    %cst_16 = arith.constant dense<0.000000e+00> : vector<128xf32>
    %41 = vector.multi_reduction <add>, %40, %cst_16 [0] : vector<8x128xf32> to vector<128xf32>
    %42 = vector.shape_cast %41 : vector<128xf32> to vector<1x128xf32>
    %cst_17 = arith.constant 1.250000e-01 : f32
    %43 = vector.broadcast %cst_17 : f32 to vector<1x128xf32>
    %44 = arith.mulf %39, %43 : vector<1x128xf32>
    %cst_18 = arith.constant 1.250000e-01 : f32
    %45 = vector.broadcast %cst_18 : f32 to vector<1x128xf32>
    %46 = arith.mulf %42, %45 : vector<1x128xf32>
    %47 = arith.mulf %44, %44 : vector<1x128xf32>
    %48 = arith.subf %46, %47 : vector<1x128xf32>
    %cst_19 = arith.constant 0.000000e+00 : f32
    %49 = vector.broadcast %cst_19 : f32 to vector<1x128xf32>
    %50 = arith.maximumf %48, %49 : vector<1x128xf32>
    %cst_20 = arith.constant 9.99999974E-6 : f32
    %51 = vector.broadcast %cst_20 : f32 to vector<1x128xf32>
    %52 = arith.addf %50, %51 : vector<1x128xf32>
    %53 = math.rsqrt %52 : vector<1x128xf32>
    %54 = arith.mulf %34, %53 : vector<1x128xf32>
    %55 = arith.mulf %44, %54 : vector<1x128xf32>
    %56 = arith.subf %35, %55 : vector<1x128xf32>
    %57 = vector.broadcast %54 : vector<1x128xf32> to vector<8x128xf32>
    %58 = arith.mulf %37, %57 : vector<8x128xf32>
    %59 = vector.broadcast %56 : vector<1x128xf32> to vector<8x128xf32>
    %60 = arith.addf %58, %59 : vector<8x128xf32>
    %cst_21 = arith.constant 0.000000e+00 : f32
    %61 = vector.broadcast %cst_21 : f32 to vector<8x128xf32>
    %62 = arith.maximumf %60, %61 : vector<8x128xf32>
    %c256 = arith.constant 256 : index
    %c0_22 = arith.constant 0 : index
    %63 = vector.load %arg2[%c256, %c0_22] : memref<384x128xbf16, #tpu.memory_space<vmem>>, vector<128x128xbf16>
    %64 = vector.extract_strided_slice %2 {offsets = [4, 0], sizes = [1, 128], strides = [1, 1]} : vector<5x128xf32> to vector<1x128xf32>
    %65 = arith.truncf %62 : vector<8x128xf32> to vector<8x128xbf16>
    %cst_23 = arith.constant dense<0.000000e+00> : vector<8x128xf32>
    %66 = tpu.matmul %65, %63, %cst_23 {dimension_numbers = #tpu.dot_dimension_numbers<[1], [0], [0], [1], [0, 0, 1, 1], [], []>} : vector<8x128xbf16>, vector<128x128xbf16>, vector<8x128xf32> -> vector<8x128xf32>
    %67 = vector.broadcast %64 : vector<1x128xf32> to vector<8x128xf32>
    %68 = arith.addf %66, %67 : vector<8x128xf32>
    %cst_24 = arith.constant 0.000000e+00 : f32
    %69 = vector.broadcast %cst_24 : f32 to vector<8x128xf32>
    %70 = arith.maximumf %68, %69 : vector<8x128xf32>
    %71 = math.absf %68 : vector<8x128xf32>
    %cst_25 = arith.constant 0.000000e+00 : f32
    %72 = vector.broadcast %cst_25 : f32 to vector<8x128xf32>
    %73 = arith.subf %72, %71 : vector<8x128xf32>
    %74 = math.exp %73 : vector<8x128xf32>
    %75 = math.log1p %74 : vector<8x128xf32>
    %76 = arith.addf %70, %75 : vector<8x128xf32>
    %77 = tpu.iota {dimensions = array<i32: 1>} : vector<8x128xi32>
    %c8_i32 = arith.constant 8 : i32
    %78 = vector.broadcast %c8_i32 : i32 to vector<8x128xi32>
    %79 = arith.cmpi sge, %77, %78 : vector<8x128xi32>
    %cst_26 = arith.constant 9.99999997E-7 : f32
    %80 = vector.broadcast %cst_26 : f32 to vector<8x128xf32>
    %81 = arith.addf %76, %80 : vector<8x128xf32>
    %82 = arith.select %79, %81, %68 : vector<8x128xi1>, vector<8x128xf32>
    %c0_27 = arith.constant 0 : index
    %c0_28 = arith.constant 0 : index
    %c0_29 = arith.constant 0 : index
    %83 = vector.load %arg4[%c0_27, %c0_28, %c0_29] : memref<1x8x128xf32, #tpu.memory_space<vmem>>, vector<1x8x128xf32>
    %84 = vector.shape_cast %83 : vector<1x8x128xf32> to vector<8x128xf32>
    %85 = vector.shape_cast %82 : vector<8x128xf32> to vector<1x8x128xf32>
    tpu.vector_store %arg4[%c0_27, %c0_28, %c0_29], %85 {strides = array<i32>} : memref<1x8x128xf32, #tpu.memory_space<vmem>>, vector<1x8x128xf32>,
    return
  }
  func.func @transform_0(%arg0: i32) -> (i32, i32, i32) {
    %c0_i32 = arith.constant 0 : i32
    %c0_i32_0 = arith.constant 0 : i32
    %c0_i32_1 = arith.constant 0 : i32
    return %arg0, %c0_i32, %c0_i32_0 : i32, i32, i32
  }
  func.func @transform_1(%arg0: i32) -> (i32, i32) {
    %c0_i32 = arith.constant 0 : i32
    %c0_i32_0 = arith.constant 0 : i32
    %c0_i32_1 = arith.constant 0 : i32
    return %c0_i32, %c0_i32_0 : i32, i32
  }
  func.func @transform_2(%arg0: i32) -> (i32, i32) {
    %c0_i32 = arith.constant 0 : i32
    %c0_i32_0 = arith.constant 0 : i32
    %c0_i32_1 = arith.constant 0 : i32
    return %c0_i32, %c0_i32_0 : i32, i32
  }
  func.func @transform_3(%arg0: i32) -> (i32, i32, i32) {
    %c0_i32 = arith.constant 0 : i32
    %c0_i32_0 = arith.constant 0 : i32
    %c0_i32_1 = arith.constant 0 : i32
    return %arg0, %c0_i32, %c0_i32_0 : i32, i32, i32
  }
}

</mosaic_0001>

<llo_original>
// kernel: tpu_custom_call.1
$region0: #{tpu_custom_call.1}
  #allocation0 [shape = 'u32[]', space=smem, size = 0x4, offset = 0x4, fixed_abs, tag = 'smem constant byte address 0x4 - core index']
  #allocation1 [shape = 'u32[72,128]{1,0:T(1,128)}', space=vmem, size = 0x9000, scoped, tag = 'internal scratch']
  %s0 = inlined_call_operand.hbm [shape: f32[1,8,128], index: 0, kind: input, shape index: {}]
  %s1 = inlined_call_operand.hbm [shape: bf16[384,128], index: 1, kind: input, shape index: {}]
  %s2 = inlined_call_operand.hbm [shape: f32[5,128], index: 2, kind: input, shape index: {}]
  %s3 = inlined_call_operand.hbm [shape: f32[1,8,128], index: 3, kind: output, shape index: {}]
  %s4 = sld [smem:[#allocation0]]
  $region34: #{tpu_custom_call.1} parent=0
    _
  %s6 = ssub.s32 1, %s4
  %s7 = scalar_select 0, %s6, %s4
  $region1: #{tpu_custom_call.1} parent=0
    #allocation2 [shape = 'u8[4096]{0}', space=vmem, size = 0x1000, scoped, tag = 'input window, operand 0, single buffered']
    #allocation3 [shape = 's32[1]{0}', space=sflag, size = 0x4, scoped, tag = 'scoped memory for tpu_custom_call.1']
    #allocation4 [shape = 's32[1]{0}', space=sflag, size = 0x4, scoped, tag = 'scoped memory for tpu_custom_call.1']
    #allocation5 [shape = 'u8[98304]{0}', space=vmem, size = 0x18000, scoped, tag = 'input window, operand 1, single buffered']
    #allocation6 [shape = 's32[1]{0}', space=sflag, size = 0x4, scoped, tag = 'scoped memory for tpu_custom_call.1']
    #allocation7 [shape = 'u8[4096]{0}', space=vmem, size = 0x1000, scoped, tag = 'input window, operand 2, single buffered']
    #allocation8 [shape = 'u8[4096]{0}', space=vmem, size = 0x1000, scoped, tag = 'output window, operand 0, single buffered']
    %8 = vsyncpa [#allocation3], 0
    %9 = vsyncpa [#allocation6], 0
    %10 = vsyncpa [#allocation4], 0
    // Predicated region
    $region2: #{tpu_custom_call.1} parent=1 // pred_check
      _
    $region3: #{tpu_custom_call.1} parent=1 // pred_check_branch
      %12 = sbr.rel (0) target = $region5
    $region4: #{tpu_custom_call.1} parent=1 // pred_region
      %14 = vsyncadd [#allocation3], 0
      %s16 = sshll.u32 %s0, 4
      %s17 = int_to_ptr.hbm [resolvable:$true] %s16
      %s18 = sshll.u32 [#allocation2], 4
      %s19 = int_to_ptr.vmem [resolvable:$true] %s18
      %21 = dma.hbm_to_vmem [thread:$0]  %s17, 128, %s19, [#allocation3]
    $region5: #{tpu_custom_call.1} parent=1 // pred_fallthru
      _
    // Predicated region
    $region6: #{tpu_custom_call.1} parent=1 // pred_check
      _
    $region7: #{tpu_custom_call.1} parent=1 // pred_check_branch
      %23 = sbr.rel (0) target = $region9
    $region8: #{tpu_custom_call.1} parent=1 // pred_region
      %25 = vsyncadd [#allocation6], 0
      %s26 = sshll.u32 %s1, 4
      %s27 = int_to_ptr.hbm [resolvable:$true] %s26
      %s28 = sshll.u32 [#allocation5], 4
      %s29 = int_to_ptr.vmem [resolvable:$true] %s28
      %34 = dma.hbm_to_vmem [thread:$0]  %s27, 3072, %s29, [#allocation6], 64, 64, 4
    $region9: #{tpu_custom_call.1} parent=1 // pred_fallthru
      _
    // Predicated region
    $region10: #{tpu_custom_call.1} parent=1 // pred_check
      _
    $region11: #{tpu_custom_call.1} parent=1 // pred_check_branch
      %36 = sbr.rel (0) target = $region13
    $region12: #{tpu_custom_call.1} parent=1 // pred_region
      %38 = vsyncadd [#allocation6], 0
      %s40 = sshll.u32 %s2, 4
      %s41 = int_to_ptr.hbm [resolvable:$true] %s40
      %s42 = sshll.u32 [#allocation7], 4
      %s43 = int_to_ptr.vmem [resolvable:$true] %s42
      %45 = dma.hbm_to_vmem [thread:$0]  %s41, 128, %s43, [#allocation6]
    $region13: #{tpu_custom_call.1} parent=1 // pred_fallthru
      _
    // Predicated region
    $region14: #{tpu_custom_call.1} parent=1 // pred_check
      _
    $region15: #{tpu_custom_call.1} parent=1 // pred_check_branch
      %47 = sbr.rel (0) target = $region17
    $region16: #{tpu_custom_call.1} parent=1 // pred_region
      %49 = dma.done [#allocation3], 128
    $region17: #{tpu_custom_call.1} parent=1 // pred_fallthru
      _
    // Predicated region
    $region18: #{tpu_custom_call.1} parent=1 // pred_check
      _
    $region19: #{tpu_custom_call.1} parent=1 // pred_check_branch
      %51 = sbr.rel (0) target = $region21
    $region20: #{tpu_custom_call.1} parent=1 // pred_region
      %53 = dma.done [#allocation6], 3072
    $region21: #{tpu_custom_call.1} parent=1 // pred_fallthru
      _
    // Predicated region
    $region22: #{tpu_custom_call.1} parent=1 // pred_check
      _
    $region23: #{tpu_custom_call.1} parent=1 // pred_check_branch
      %55 = sbr.rel (0) target = $region25
    $region24: #{tpu_custom_call.1} parent=1 // pred_region
      %57 = dma.done [#allocation6], 128
    $region25: #{tpu_custom_call.1} parent=1 // pred_fallthru
      _
    %v58 = vld [vmem:[#allocation2] sm:$0xff]
    %v59 = vld [vmem:[#allocation7] sm:$0x1f]
    %v60 = vld [vmem:[#allocation5] sm:$0xf]
    %v61 = vld [vmem:[#allocation5 + $0x4] sm:$0xf]
    %v62 = vld [vmem:[#allocation5 + $0x8] sm:$0xf]
    %v63 = vld [vmem:[#allocation5 + $0xc] sm:$0xf]
    %v64 = vld [vmem:[#allocation5 + $0x10] sm:$0xf]
    %v65 = vld [vmem:[#allocation5 + $0x14] sm:$0xf]
    %v66 = vld [vmem:[#allocation5 + $0x18] sm:$0xf]
    %v67 = vld [vmem:[#allocation5 + $0x1c] sm:$0xf]
    %v68 = vld [vmem:[#allocation5 + $0x20] sm:$0xf]
    %v69 = vld [vmem:[#allocation5 + $0x24] sm:$0xf]
    %v70 = vld [vmem:[#allocation5 + $0x28] sm:$0xf]
    %v71 = vld [vmem:[#allocation5 + $0x2c] sm:$0xf]
    %v72 = vld [vmem:[#allocation5 + $0x30] sm:$0xf]
    %v73 = vld [vmem:[#allocation5 + $0x34] sm:$0xf]
    %v74 = vld [vmem:[#allocation5 + $0x38] sm:$0xf]
    %v75 = vld [vmem:[#allocation5 + $0x3c] sm:$0xf]
    %v76 = vpack.c.bf16 %v58, %v58
    %v93 = vunpack.c.l.b16 %v60
    %v94 = vunpack.c.l.b16 %v61
    %v95 = vunpack.c.l.b16 %v62
    %v96 = vunpack.c.l.b16 %v63
    %v97 = vunpack.c.l.b16 %v64
    %v98 = vunpack.c.l.b16 %v65
    %v99 = vunpack.c.l.b16 %v66
    %v100 = vunpack.c.l.b16 %v67
    %v101 = vunpack.c.l.b16 %v68
    %v102 = vunpack.c.l.b16 %v69
    %v103 = vunpack.c.l.b16 %v70
    %v104 = vunpack.c.l.b16 %v71
    %v105 = vunpack.c.l.b16 %v72
    %v106 = vunpack.c.l.b16 %v73
    %v107 = vunpack.c.l.b16 %v74
    %v108 = vunpack.c.l.b16 %v75
    %v109 = vpack.c.b16 %v94, %v93
    %v110 = vpack.c.b16 %v96, %v95
    %v111 = vpack.c.b16 %v98, %v97
    %v112 = vpack.c.b16 %v100, %v99
    %v113 = vpack.c.b16 %v102, %v101
    %v114 = vpack.c.b16 %v104, %v103
    %v115 = vpack.c.b16 %v106, %v105
    %v116 = vpack.c.b16 %v108, %v107
    %125 = vmatpush.bf16.msra.mxu0 %v116
    %126 = vmatpush.bf16.msra.mxu0 %v115
    %127 = vmatpush.bf16.msra.mxu0 %v114
    %128 = vmatpush.bf16.msra.mxu0 %v113
    %129 = vmatpush.bf16.msra.mxu0 %v112
    %130 = vmatpush.bf16.msra.mxu0 %v111
    %131 = vmatpush.bf16.msra.mxu0 %v110
    %132 = vmatpush.bf16.msra.mxu0 %v109
    %133 = vmatmul.bf16.gmra.mxu0 %v76
    %v134 = vpop.f32.mrf.mxu0
    %v135 = vadd.f32 0.0, %v134
    %v136 = vpop.f32.mrf.mxu0
    %137 = vdwg.mxu0
    %v138 = vrot.slane %v135, 4
    %v139 = vadd.f32 %v135, %v138
    %v140 = vrot.slane %v139, 2
    %v141 = vadd.f32 %v139, %v140
    %v142 = vrot.slane %v141, 1
    %v143 = vadd.f32 %v141, %v142
    %v144 = vmul.f32 %v135, %v135
    %v145 = vrot.slane %v144, 4
    %v146 = vadd.f32 %v144, %v145
    %v147 = vrot.slane %v146, 2
    %v148 = vadd.f32 %v146, %v147
    %v149 = vrot.slane %v148, 1
    %v150 = vadd.f32 %v148, %v149
    %v151 = vmul.f32 %v143, 0.125
    %v152 = vmul.f32 %v150, 0.125
    %v153 = vmul.f32 %v151, %v151
    %v154 = vsub.f32 %v152, %v153
    %v155 = vmax.f32 %v154, 0.0
    %v156 = vadd.f32 %v155, 1e-05
    %v157 = vrsqrt.pop %v156
    %v158 = vmul.f32 %v157, %v156
    %v159 = vmul.f32 %v158, %v157
    %v160 = vmul.f32 0.5, %v159
    %v161 = vsub.f32 1.5, %v160
    %v162 = vmul.f32 %v157, %v161
    %vm163 = vweird.f32 %v156
    %vm164 = vweird.f32 %v157
    %vm165 = vmor %vm163, %vm164
    %v166 = vsel %vm165, %v157, %v162
    %v167 = vmul.f32 %v59, %v166
    %v168 = vmul.f32 %v151, %v167
    %v170 = vrot.slane %v168, 7
    %v172 = vsub.f32 %v59, %v170
    %v173 = vperm.slane %v167, 0
    %v174 = vmul.f32 %v135, %v173
    %v175 = vperm.slane %v172, 1
    %v176 = vadd.f32 %v174, %v175
    %v177 = vmax.f32 %v176, 0.0
    %v178 = vld [vmem:[#allocation5 + $0x40] sm:$0xf]
    %v179 = vld [vmem:[#allocation5 + $0x44] sm:$0xf]
    %v180 = vld [vmem:[#allocation5 + $0x48] sm:$0xf]
    %v181 = vld [vmem:[#allocation5 + $0x4c] sm:$0xf]
    %v182 = vld [vmem:[#allocation5 + $0x50] sm:$0xf]
    %v183 = vld [vmem:[#allocation5 + $0x54] sm:$0xf]
    %v184 = vld [vmem:[#allocation5 + $0x58] sm:$0xf]
    %v185 = vld [vmem:[#allocation5 + $0x5c] sm:$0xf]
    %v186 = vld [vmem:[#allocation5 + $0x60] sm:$0xf]
    %v187 = vld [vmem:[#allocation5 + $0x64] sm:$0xf]
    %v188 = vld [vmem:[#allocation5 + $0x68] sm:$0xf]
    %v189 = vld [vmem:[#allocation5 + $0x6c] sm:$0xf]
    %v190 = vld [vmem:[#allocation5 + $0x70] sm:$0xf]
    %v191 = vld [vmem:[#allocation5 + $0x74] sm:$0xf]
    %v192 = vld [vmem:[#allocation5 + $0x78] sm:$0xf]
    %v193 = vld [vmem:[#allocation5 + $0x7c] sm:$0xf]
    %v194 = vpack.c.bf16 %v177, %v177
    %v211 = vunpack.c.l.b16 %v178
    %v212 = vunpack.c.l.b16 %v179
    %v213 = vunpack.c.l.b16 %v180
    %v214 = vunpack.c.l.b16 %v181
    %v215 = vunpack.c.l.b16 %v182
    %v216 = vunpack.c.l.b16 %v183
    %v217 = vunpack.c.l.b16 %v184
    %v218 = vunpack.c.l.b16 %v185
    %v219 = vunpack.c.l.b16 %v186
    %v220 = vunpack.c.l.b16 %v187
    %v221 = vunpack.c.l.b16 %v188
    %v222 = vunpack.c.l.b16 %v189
    %v223 = vunpack.c.l.b16 %v190
    %v224 = vunpack.c.l.b16 %v191
    %v225 = vunpack.c.l.b16 %v192
    %v226 = vunpack.c.l.b16 %v193
    %v227 = vpack.c.b16 %v212, %v211
    %v228 = vpack.c.b16 %v214, %v213
    %v229 = vpack.c.b16 %v216, %v215
    %v230 = vpack.c.b16 %v218, %v217
    %v231 = vpack.c.b16 %v220, %v219
    %v232 = vpack.c.b16 %v222, %v221
    %v233 = vpack.c.b16 %v224, %v223
    %v234 = vpack.c.b16 %v226, %v225
    %243 = vmatpush.bf16.msra.mxu0 %v234
    %244 = vmatpush.bf16.msra.mxu0 %v233
    %245 = vmatpush.bf16.msra.mxu0 %v232
    %246 = vmatpush.bf16.msra.mxu0 %v231
    %247 = vmatpush.bf16.msra.mxu0 %v230
    %248 = vmatpush.bf16.msra.mxu0 %v229
    %249 = vmatpush.bf16.msra.mxu0 %v228
    %250 = vmatpush.bf16.msra.mxu0 %v227
    %251 = vmatmul.bf16.gmra.mxu0 %v194
    %v252 = vpop.f32.mrf.mxu0
    %v253 = vadd.f32 0.0, %v252
    %v254 = vpop.f32.mrf.mxu0
    %255 = vdwg.mxu0
    %v256 = vrot.slane %v253, 4
    %v257 = vadd.f32 %v253, %v256
    %v258 = vrot.slane %v257, 2
    %v259 = vadd.f32 %v257, %v258
    %v260 = vrot.slane %v259, 1
    %v261 = vadd.f32 %v259, %v260
    %v262 = vmul.f32 %v253, %v253
    %v263 = vrot.slane %v262, 4
    %v264 = vadd.f32 %v262, %v263
    %v265 = vrot.slane %v264, 2
    %v266 = vadd.f32 %v264, %v265
    %v267 = vrot.slane %v266, 1
    %v268 = vadd.f32 %v266, %v267
    %v269 = vmul.f32 %v261, 0.125
    %v270 = vmul.f32 %v268, 0.125
    %v271 = vmul.f32 %v269, %v269
    %v272 = vsub.f32 %v270, %v271
    %v273 = vmax.f32 %v272, 0.0
    %v274 = vadd.f32 %v273, 1e-05
    %v275 = vrsqrt.pop %v274
    %v276 = vmul.f32 %v275, %v274
    %v277 = vmul.f32 %v276, %v275
    %v278 = vmul.f32 0.5, %v277
    %v279 = vsub.f32 1.5, %v278
    %v280 = vmul.f32 %v275, %v279
    %vm281 = vweird.f32 %v274
    %vm282 = vweird.f32 %v275
    %vm283 = vmor %vm281, %vm282
    %v284 = vsel %vm283, %v275, %v280
    %v285 = vmul.f32 %v59, %v284
    %v286 = vmul.f32 %v269, %v285
    %v288 = vrot.slane %v286, 7
    %v290 = vsub.f32 %v59, %v288
    %v291 = vperm.slane %v285, 2
    %v292 = vmul.f32 %v253, %v291
    %v293 = vperm.slane %v290, 3
    %v294 = vadd.f32 %v292, %v293
    %v295 = vmax.f32 %v294, 0.0
    %v296 = vld [vmem:[#allocation5 + $0x80] sm:$0xf]
    %v297 = vld [vmem:[#allocation5 + $0x84] sm:$0xf]
    %v298 = vld [vmem:[#allocation5 + $0x88] sm:$0xf]
    %v299 = vld [vmem:[#allocation5 + $0x8c] sm:$0xf]
    %v300 = vld [vmem:[#allocation5 + $0x90] sm:$0xf]
    %v301 = vld [vmem:[#allocation5 + $0x94] sm:$0xf]
    %v302 = vld [vmem:[#allocation5 + $0x98] sm:$0xf]
    %v303 = vld [vmem:[#allocation5 + $0x9c] sm:$0xf]
    %v304 = vld [vmem:[#allocation5 + $0xa0] sm:$0xf]
    %v305 = vld [vmem:[#allocation5 + $0xa4] sm:$0xf]
    %v306 = vld [vmem:[#allocation5 + $0xa8] sm:$0xf]
    %v307 = vld [vmem:[#allocation5 + $0xac] sm:$0xf]
    %v308 = vld [vmem:[#allocation5 + $0xb0] sm:$0xf]
    %v309 = vld [vmem:[#allocation5 + $0xb4] sm:$0xf]
    %v310 = vld [vmem:[#allocation5 + $0xb8] sm:$0xf]
    %v311 = vld [vmem:[#allocation5 + $0xbc] sm:$0xf]
    %v312 = vpack.c.bf16 %v295, %v295
    %v313 = vperm.slane %v59, 4
    %v330 = vunpack.c.l.b16 %v296
    %v331 = vunpack.c.l.b16 %v297
    %v332 = vunpack.c.l.b16 %v298
    %v333 = vunpack.c.l.b16 %v299
    %v334 = vunpack.c.l.b16 %v300
    %v335 = vunpack.c.l.b16 %v301
    %v336 = vunpack.c.l.b16 %v302
    %v337 = vunpack.c.l.b16 %v303
    %v338 = vunpack.c.l.b16 %v304
    %v339 = vunpack.c.l.b16 %v305
    %v340 = vunpack.c.l.b16 %v306
    %v341 = vunpack.c.l.b16 %v307
    %v342 = vunpack.c.l.b16 %v308
    %v343 = vunpack.c.l.b16 %v309
    %v344 = vunpack.c.l.b16 %v310
    %v345 = vunpack.c.l.b16 %v311
    %v346 = vpack.c.b16 %v331, %v330
    %v347 = vpack.c.b16 %v333, %v332
    %v348 = vpack.c.b16 %v335, %v334
    %v349 = vpack.c.b16 %v337, %v336
    %v350 = vpack.c.b16 %v339, %v338
    %v351 = vpack.c.b16 %v341, %v340
    %v352 = vpack.c.b16 %v343, %v342
    %v353 = vpack.c.b16 %v345, %v344
    %362 = vmatpush.bf16.msra.mxu0 %v353
    %363 = vmatpush.bf16.msra.mxu0 %v352
    %364 = vmatpush.bf16.msra.mxu0 %v351
    %365 = vmatpush.bf16.msra.mxu0 %v350
    %366 = vmatpush.bf16.msra.mxu0 %v349
    %367 = vmatpush.bf16.msra.mxu0 %v348
    %368 = vmatpush.bf16.msra.mxu0 %v347
    %369 = vmatpush.bf16.msra.mxu0 %v346
    %370 = vmatmul.bf16.gmra.mxu0 %v312
    %v371 = vpop.f32.mrf.mxu0
    %v372 = vadd.f32 %v313, %v371
    %v373 = vpop.f32.mrf.mxu0
    %374 = vdwg.mxu0
    %v375 = vmax.f32 %v372, 0.0
    %v376 = vand.u32 2147483647, %v372
    %v377 = vsub.f32 0.0, %v376
    %v378 = vmul.f32 %v377, 1.442695
    %v379 = vpow.pop %v378
    %v380 = vadd.f32 %v379, 1.0
    %v381 = vlog2.pop %v380
    %v382 = vmul.f32 %v381, 0.6931472
    %v383 = vmul.f32 -0.5, %v379
    %v384 = vadd.f32 %v383, 1.0
    %v385 = vmul.f32 %v384, %v379
    %v386 = vand.u32 2147483647, %v379
    %vm387 = vcmp.lt.f32.partialorder %v386, 0.0004427343
    %v388 = vsel %vm387, %v385, %v382
    %v389 = vadd.f32 %v375, %v388
    %v390 = vlaneseq
    %v391 = vand.u32 %v390, 127
    %vm392 = vcmp.ge.s32.totalorder %v391, 8
    %v393 = vadd.f32 %v389, 1e-06
    %v394 = vsel %vm392, %v393, %v372
    %395 = vst [vmem:[#allocation8] sm:$0xff] %v394
    // Predicated region
    $region26: #{tpu_custom_call.1} parent=1 // pred_check
      _
    $region27: #{tpu_custom_call.1} parent=1 // pred_check_branch
      %397 = sbr.rel (0) target = $region29
    $region28: #{tpu_custom_call.1} parent=1 // pred_region
      %399 = vsyncadd [#allocation4], 0
      %s401 = sshll.u32 [#allocation8], 4
      %s402 = int_to_ptr.vmem [resolvable:$true] %s401
      %s403 = sshll.u32 %s3, 4
      %s404 = int_to_ptr.hbm [resolvable:$true] %s403
      %406 = dma.vmem_to_hbm [thread:$0]  %s402, 128, %s404, [#allocation4]
    $region29: #{tpu_custom_call.1} parent=1 // pred_fallthru
      _
    // Predicated region
    $region30: #{tpu_custom_call.1} parent=1 // pred_check
      _
    $region31: #{tpu_custom_call.1} parent=1 // pred_check_branch
      %408 = sbr.rel (0) target = $region33
    $region32: #{tpu_custom_call.1} parent=1 // pred_region
      %410 = dma.done [#allocation4], 128
    $region33: #{tpu_custom_call.1} parent=1 // pred_fallthru
      _
    %411 = vsyncpa [#allocation3], 1
    %412 = vsyncpa [#allocation6], 1
    %413 = vsyncpa [#allocation4], 1

</llo_original>
